<compile_context>
chip_gen: v5e
topology: v5e:2x2
jax: 0.10.0
libtpu: 0.0.40
codegen_flags: <defaults>
</compile_context>

<pallas_src>
import math

import jax
import jax.numpy as jnp
from jax.experimental import pallas as pl
from jax.experimental.pallas import tpu as pltpu


def _directional_embedding_kernel(x_ref, m_ref, b_ref, o_ref):
    # x_ref: (TR, kL)   m_ref: (kL, kD)   b_ref: (1, kD)   o_ref: (TR, kD)
    x = x_ref[...].astype(jnp.float32)                  # in-kernel cast (no extra HBM copy)
    y = jnp.dot(x, m_ref[...], preferred_element_type=jnp.float32)
    y = y + b_ref[...]                                  # tiny resident bias; VPU add is free here
    o_ref[...] = jnp.maximum(y, 0.0).astype(o_ref.dtype)  # ReLU; one lane-dense full-width store


def _pick_block_rows(R, KL, KD, x_itemsize, o_itemsize):
    """Rows per grid step, sized from a VMEM byte budget (not a fixed list)."""
    budget = 10 * 1024 * 1024                    # under the smallest scoped default (v5e 16 MiB)
    const_bytes = 2 * (KL * KD + KD) * 4         # resident folded matrix + bias (2 pipeline bufs)
    per_row = 2 * (KL * x_itemsize + KD * o_itemsize)   # double-buffered input + output tile
    rows = (budget - const_bytes) // max(per_row, 1)
    rows = max(8, (int(rows) // 8) * 8)
    if rows >= R:
        rows = R                                  # single full block
    # Dual-TensorCore chips (v7x): give big problems >= 2 grid steps so the
    # "parallel" axis actually shards; don't over-split small ones (~0.35 us/step).
    if R >= 512 and rows > (R + 1) // 2:
        rows = max(8, -(-((R + 1) // 2) // 8) * 8)
    return rows


def directional_embedding(direction, weight, bias, *,
                          out_dtype=jnp.float32, block_rows=None):
    """relu(Conv1d(1, dim, 1)(direction[:, None, :]).view(B, -1)).

    direction: (B, L).  weight: any shape flattening to (dim,) (e.g. Conv1d's
    (dim, 1, 1)).  bias: (dim,).  Returns (B, dim*L) in `out_dtype` (float32
    matches the PyTorch module; bf16 halves the HBM store traffic).
    """
    B, L = direction.shape
    w = jnp.asarray(weight).reshape(-1).astype(jnp.float32)   # (dim,)
    b = jnp.asarray(bias).reshape(-1).astype(jnp.float32)     # (dim,)
    dim = w.shape[0]
    D = dim * L

    # Fold k batch rows per output row so the stored row width k*D is a
    # multiple of 128 lanes.  k must divide B; fall back to gcd(B, k) otherwise.
    k = 128 // math.gcd(D, 128)
    if B % k != 0:
        k = math.gcd(B, k)
    R, KL, KD = B // k, k * L, k * D

    # Folded conv matrix (block-diagonal) + repeated bias, built from static
    # weights.  Run under jit with the weights closed over so this is
    # constant-folded rather than recomputed on-device every forward.
    m_block = (jnp.eye(L, dtype=jnp.float32)[:, None, :] * w[None, :, None]).reshape(L, D)
    mat = jnp.kron(jnp.eye(k, dtype=jnp.float32), m_block)          # (k*L, k*D)
    b_rep = jnp.tile(jnp.repeat(b, L), k).reshape(1, KD)            # (1, k*D)

    x = direction.reshape(R, KL)   # free row-major view; keep native dtype (no wrapper astype copy)

    if block_rows is None:
        block_rows = _pick_block_rows(R, KL, KD,
                                      jnp.dtype(direction.dtype).itemsize,
                                      jnp.dtype(out_dtype).itemsize)
    block_rows = min(block_rows, R)
    grid = (pl.cdiv(R, block_rows),)

    # TODO(synk): if dim*L**2 grows large enough that the folded matrix dominates
    # VMEM (binding on v7x's 64 MiB), tile the grid over the output-width axis too.
    out = pl.pallas_call(
        _directional_embedding_kernel,
        out_shape=jax.ShapeDtypeStruct((R, KD), out_dtype),
        grid=grid,
        in_specs=[
            pl.BlockSpec((block_rows, KL), lambda i: (i, 0)),   # direction tile
            pl.BlockSpec((KL, KD), lambda i: (0, 0)),           # folded conv matrix (resident)
            pl.BlockSpec((1, KD), lambda i: (0, 0)),            # repeated bias (resident)
        ],
        out_specs=pl.BlockSpec((block_rows, KD), lambda i: (i, 0)),
        compiler_params=pltpu.CompilerParams(
            dimension_semantics=("parallel",),
            vmem_limit_bytes=32 * 1024 * 1024,
        ),
    )(x, mat, b_rep)

    return out.reshape(B, D)       # free row-major view back to (B, dim*L)


def _reference(direction, weight, bias):
    # Pure-JAX mirror of the PyTorch forward (Conv1d(1, dim, 1) + view + ReLU).
    B, L = direction.shape
    w = weight.reshape(-1).astype(jnp.float32)
    b = bias.reshape(-1).astype(jnp.float32)
    out = w[None, :, None] * direction.astype(jnp.float32)[:, None, :] + b[None, :, None]
    return jnp.maximum(out.reshape(B, -1), 0.0)


if __name__ == "__main__":
    key = jax.random.PRNGKey(0)
    k_dir, k_w, k_b = jax.random.split(key, 3)

    batch, length, dim = 16, 3, 32   # direction (16, 3) -> output (16, 96); fold k=4 -> 384 lanes

    direction = jax.random.normal(k_dir, (batch, length), dtype=jnp.float32)
    weight = jax.random.normal(k_w, (dim, 1, 1), dtype=jnp.float32) * 0.5   # Conv1d(1, dim, 1).weight
    bias = jax.random.normal(k_b, (dim,), dtype=jnp.float32) * 0.5

    # Weights are static module parameters: close over them so the folded conv
    # matrix is built (and constant-folded) inside the same jit as the pallas_call.
    fwd = jax.jit(lambda d: directional_embedding(d, weight, bias))

    out = jax.block_until_ready(fwd(direction))
    ref = _reference(direction, weight, bias)

    assert out.shape == (batch, dim * length)
    assert out.dtype == jnp.float32
    assert jnp.allclose(out, ref, atol=1e-3, rtol=1e-3), "mismatch vs reference"

    print("KERNEL_OK")
</pallas_src>

<mosaic_0001>
module attributes {stable_mosaic.version = 11 : i64} {
  func.func @_directional_embedding_kernel(%arg0: i32, %arg1: memref<4x12xf32, #tpu.memory_space<vmem>>, %arg2: memref<12x384xf32, #tpu.memory_space<vmem>>, %arg3: memref<1x384xf32, #tpu.memory_space<vmem>>, %arg4: memref<4x384xf32, #tpu.memory_space<vmem>>) attributes {dimension_semantics = [#tpu.dimension_semantics<parallel>], iteration_bounds = array<i64: 1>, scalar_prefetch = 0 : i64, scratch_operands = 0 : i64, tpu.core_type = #tpu.core_type<tc>, window_params = [{transform_indices = @transform_0, window_bounds = array<i64: 4, 12>}, {pipeline_mode = #tpu.pipeline_mode<synchronous>, transform_indices = @transform_1, window_bounds = array<i64: 12, 384>}, {pipeline_mode = #tpu.pipeline_mode<synchronous>, transform_indices = @transform_2, window_bounds = array<i64: 1, 384>}, {transform_indices = @transform_3, window_bounds = array<i64: 4, 384>}]} {
    %c0 = arith.constant 0 : index
    %c0_0 = arith.constant 0 : index
    %0 = vector.load %arg1[%c0, %c0_0] : memref<4x12xf32, #tpu.memory_space<vmem>>, vector<4x12xf32>
    %c0_1 = arith.constant 0 : index
    %c0_2 = arith.constant 0 : index
    %1 = vector.load %arg2[%c0_1, %c0_2] : memref<12x384xf32, #tpu.memory_space<vmem>>, vector<12x384xf32>
    %cst = arith.constant dense<0.000000e+00> : vector<4x384xf32>
    %2 = tpu.matmul %0, %1, %cst {dimension_numbers = #tpu.dot_dimension_numbers<[1], [0], [0], [1], [0, 0, 1, 1], [], []>} : vector<4x12xf32>, vector<12x384xf32>, vector<4x384xf32> -> vector<4x384xf32>
    %c0_3 = arith.constant 0 : index
    %c0_4 = arith.constant 0 : index
    %3 = vector.load %arg3[%c0_3, %c0_4] : memref<1x384xf32, #tpu.memory_space<vmem>>, vector<1x384xf32>
    %4 = vector.broadcast %3 : vector<1x384xf32> to vector<4x384xf32>
    %5 = arith.addf %2, %4 : vector<4x384xf32>
    %cst_5 = arith.constant 0.000000e+00 : f32
    %6 = vector.broadcast %cst_5 : f32 to vector<4x384xf32>
    %7 = arith.maximumf %5, %6 : vector<4x384xf32>
    %c0_6 = arith.constant 0 : index
    %c0_7 = arith.constant 0 : index
    %8 = vector.load %arg4[%c0_6, %c0_7] : memref<4x384xf32, #tpu.memory_space<vmem>>, vector<4x384xf32>
    tpu.vector_store %arg4[%c0_6, %c0_7], %7 {strides = array<i32>} : memref<4x384xf32, #tpu.memory_space<vmem>>, vector<4x384xf32>,
    return
  }
  func.func @transform_0(%arg0: i32) -> (i32, i32) {
    %c0_i32 = arith.constant 0 : i32
    %c0_i32_0 = arith.constant 0 : i32
    return %arg0, %c0_i32 : i32, i32
  }
  func.func @transform_1(%arg0: i32) -> (i32, i32) {
    %c0_i32 = arith.constant 0 : i32
    %c0_i32_0 = arith.constant 0 : i32
    %c0_i32_1 = arith.constant 0 : i32
    return %c0_i32, %c0_i32_0 : i32, i32
  }
  func.func @transform_2(%arg0: i32) -> (i32, i32) {
    %c0_i32 = arith.constant 0 : i32
    %c0_i32_0 = arith.constant 0 : i32
    %c0_i32_1 = arith.constant 0 : i32
    return %c0_i32, %c0_i32_0 : i32, i32
  }
  func.func @transform_3(%arg0: i32) -> (i32, i32) {
    %c0_i32 = arith.constant 0 : i32
    %c0_i32_0 = arith.constant 0 : i32
    return %arg0, %c0_i32 : i32, i32
  }
}

</mosaic_0001>

<llo_original>
// kernel: tile.6
$region0: #{tile.6}
  #allocation0 [shape = 's32[1]{0}', space=sflag, size = 0x4, scoped, tag = 'scoped memory for tile.6']
  %s0 = inlined_call_operand.vmem [shape: f32[96], index: 0, kind: input, shape index: {}]
  %s1 = inlined_call_operand.vmem [shape: f32[4,96], index: 1, kind: output, shape index: {}]
  // Predicated region
  $region2: #{tile.6} parent=0 // pred_check
    _
  $region3: #{tile.6} parent=0 // pred_check_branch
    %3 = sbr.rel (0) target = $region5
  $region4: #{tile.6} parent=0 // pred_region
    _
  $region5: #{tile.6} parent=0 // pred_fallthru
    _
  %v4 = vld [vmem:[%s0] ss:$0 sm:$0xff]
  %5 = vst [vmem:[%s1] sm:$0xf] %v4

// kernel: tile.7
$region0: #{tile.7}
  %s0 = inlined_call_operand.vmem [shape: f32[4,96], index: 0, kind: input, shape index: {}]
  %s1 = inlined_call_operand.vmem [shape: f32[1,384], index: 1, kind: output, shape index: {}]
  $region1: #{tile.7} parent=0
    #allocation0 [shape = 'u8[12288]{0}', space=vmem, size = 0x3000, scoped, tag = 'scoped mem for output reshape']
    #allocation1 [shape = 'u8[4096]{0}', space=vmem, size = 0x1000, scoped, tag = 'scoped mem for input reshape']
    %s3 = ssub.s32 16, 1
    %v4 = vld [vmem:[%s0] sm:%s3]
    %5 = vst [vmem:[#allocation1] sm:%s3] %v4
    %v6 = vld [vmem:[#allocation1] sm:$0x1]
    %vm7 = vcmask 785408
    %8 = vst.msk [vmem:[#allocation0] sm:$0x1] %vm7, %v6
    %s9 = scalar_lea.vmem [#allocation1], 1
    %v10 = vld [vmem:[%s9] sm:$0x1]
    %s11 = scalar_lea.vmem [#allocation1], 1
    %v12 = vld [vmem:[%s11] sm:$0x1]
    %vm13 = vcmask 261120
    %v14 = vsel %vm13, %v12, %v10
    %15 = vrot.lane.b32.xlu0 %v14, 96
    %v16 = vpop.permute.xlu0 %15
    %vm17 = vcmask 523264
    %s18 = scalar_lea.vmem [#allocation0], 8
    %19 = vst.msk [vmem:[%s18] sm:$0x1] %vm17, %v16
    %vm20 = vcmask 1048320
    %21 = vst.msk [vmem:[#allocation0] sm:$0x1] %vm20, %v16
    %s22 = scalar_lea.vmem [#allocation1], 2
    %v23 = vld [vmem:[%s22] sm:$0x1]
    %s24 = scalar_lea.vmem [#allocation1], 2
    %v25 = vld [vmem:[%s24] sm:$0x1]
    %vm26 = vcmask 523264
    %v27 = vsel %vm26, %v25, %v23
    %28 = vrot.lane.b32.xlu0 %v27, 64
    %v29 = vpop.permute.xlu0 %28
    %vm30 = vcmask 261120
    %s31 = scalar_lea.vmem [#allocation0], 16
    %32 = vst.msk [vmem:[%s31] sm:$0x1] %vm30, %v29
    %vm33 = vcmask 1048064
    %s34 = scalar_lea.vmem [#allocation0], 8
    %35 = vst.msk [vmem:[%s34] sm:$0x1] %vm33, %v29
    %s36 = scalar_lea.vmem [#allocation1], 3
    %v37 = vld [vmem:[%s36] sm:$0x1]
    %38 = vrot.lane.b32.xlu0 %v37, 32
    %v39 = vpop.permute.xlu0 %38
    %vm40 = vcmask 1047808
    %s41 = scalar_lea.vmem [#allocation0], 16
    %42 = vst.msk [vmem:[%s41] sm:$0x1] %vm40, %v39
    %s44 = ssub.s32 2, 1
    %v45 = vld [vmem:[#allocation0] sm:%s44]
    %s47 = ssub.s32 2, 1
    %48 = vst [vmem:[%s1] sm:%s47] %v45
    %s49 = scalar_lea.vmem [#allocation0], 8
    %v50 = vld [vmem:[%s49] sm:%s44]
    %s52 = ssub.s32 2, 1
    %s53 = scalar_lea.vmem %s1, 1
    %54 = vst [vmem:[%s53] sm:%s52] %v50
    %s55 = scalar_lea.vmem [#allocation0], 16
    %v56 = vld [vmem:[%s55] sm:%s44]
    %s58 = ssub.s32 2, 1
    %s59 = scalar_lea.vmem %s1, 2
    %60 = vst [vmem:[%s59] sm:%s58] %v56

// kernel: _lambda_.1
$region0: #{_lambda_.1}
  #allocation0 [shape = 'u32[]', space=smem, size = 0x4, offset = 0x4, fixed_abs, tag = 'smem constant byte address 0x4 - core index']
  #allocation1 [shape = 'u32[72,128]{1,0:T(1,128)}', space=vmem, size = 0x9000, scoped, tag = 'internal scratch']
  %s0 = inlined_call_operand.vmem [shape: f32[4,12], index: 0, kind: input, shape index: {}]
  %s1 = inlined_call_operand.vmem [shape: f32[12,384], index: 1, kind: input, shape index: {}]
  %s2 = inlined_call_operand.vmem [shape: f32[1,384], index: 2, kind: input, shape index: {}]
  %s3 = inlined_call_operand.vmem [shape: f32[4,384], index: 3, kind: output, shape index: {}]
  %s4 = sld [smem:[#allocation0]]
  $region22: #{_lambda_.1} parent=0
    _
  %s6 = ssub.s32 1, %s4
  %s7 = scalar_select 0, %s6, %s4
  // Predicated region
  $region2: #{_lambda_.1} parent=0 // pred_check
    _
  $region3: #{_lambda_.1} parent=0 // pred_check_branch
    %9 = sbr.rel (0) target = $region5
  $region4: #{_lambda_.1} parent=0 // pred_region
    _
  $region5: #{_lambda_.1} parent=0 // pred_fallthru
    _
  // Predicated region
  $region6: #{_lambda_.1} parent=0 // pred_check
    _
  $region7: #{_lambda_.1} parent=0 // pred_check_branch
    %11 = sbr.rel (0) target = $region9
  $region8: #{_lambda_.1} parent=0 // pred_region
    _
  $region9: #{_lambda_.1} parent=0 // pred_fallthru
    _
  // Predicated region
  $region10: #{_lambda_.1} parent=0 // pred_check
    _
  $region11: #{_lambda_.1} parent=0 // pred_check_branch
    %13 = sbr.rel (0) target = $region13
  $region12: #{_lambda_.1} parent=0 // pred_region
    _
  $region13: #{_lambda_.1} parent=0 // pred_fallthru
    _
  %v14 = vld [vmem:[%s0] sm:$0xf]
  %v15 = vld [vmem:[%s1] sm:$0xff]
  %v16 = vld [vmem:[%s1 + $0x8] sm:$0xff]
  %v17 = vld [vmem:[%s1 + $0x10] sm:$0xff]
  %v18 = vld [vmem:[%s1 + $0x18] sm:$0xf]
  %v19 = vld [vmem:[%s1 + $0x20] sm:$0xf]
  %v20 = vld [vmem:[%s1 + $0x28] sm:$0xf]
  %v21 = vld [vmem:[%s2] sm:$0x7]
  %v23 = vperm.slane %v21, 0
  %v24 = vperm.slane %v21, 1
  %v25 = vperm.slane %v21, 2
  %vm29 = vcmask 97280
  %v31 = vsel %vm29, %v14, 0
  %vm33 = vcmask 1043456
  %v35 = vsel %vm33, %v18, 0
  %v38 = vsel %vm33, %v19, 0
  %v41 = vsel %vm33, %v20, 0
  %43 = vmatpush.msra.mxu0 0.0
  %44 = vmatpush.msra.mxu0 0.0
  %45 = vmatpush.msra.mxu0 0.0
  %46 = vmatpush.msra.mxu0 0.0
  %47 = vmatpush.msra.mxu0 0.0
  %48 = vmatpush.msra.mxu0 0.0
  %49 = vmatpush.msra.mxu0 0.0
  %50 = vmatpush.msra.mxu0 0.0
  %51 = vmatpush.msra.mxu0 0.0
  %52 = vmatpush.msra.mxu0 0.0
  %53 = vmatpush.msra.mxu0 0.0
  %54 = vmatpush.msra.mxu0 0.0
  %55 = vmatpush.msra.mxu0 0.0
  %56 = vmatpush.msra.mxu0 0.0
  %57 = vmatpush.msra.mxu0 %v35
  %58 = vmatpush.msra.mxu0 %v15
  %59 = vmatmul.f32.gmra.mxu0 %v31
  %v60 = vpop.f32.mrf.mxu0
  %v61 = vadd.f32 %v23, %v60
  %62 = vdwg.mxu0
  %63 = vmatpush.msra.mxu0 0.0
  %64 = vmatpush.msra.mxu0 0.0
  %65 = vmatpush.msra.mxu0 0.0
  %66 = vmatpush.msra.mxu0 0.0
  %67 = vmatpush.msra.mxu0 0.0
  %68 = vmatpush.msra.mxu0 0.0
  %69 = vmatpush.msra.mxu0 0.0
  %70 = vmatpush.msra.mxu0 0.0
  %71 = vmatpush.msra.mxu0 0.0
  %72 = vmatpush.msra.mxu0 0.0
  %73 = vmatpush.msra.mxu0 0.0
  %74 = vmatpush.msra.mxu0 0.0
  %75 = vmatpush.msra.mxu0 0.0
  %76 = vmatpush.msra.mxu0 0.0
  %77 = vmatpush.msra.mxu0 %v38
  %78 = vmatpush.msra.mxu0 %v16
  %79 = vmatmul.f32.gmra.mxu0 %v31
  %v80 = vpop.f32.mrf.mxu0
  %v81 = vadd.f32 %v24, %v80
  %82 = vdwg.mxu0
  %83 = vmatpush.msra.mxu0 0.0
  %84 = vmatpush.msra.mxu0 0.0
  %85 = vmatpush.msra.mxu0 0.0
  %86 = vmatpush.msra.mxu0 0.0
  %87 = vmatpush.msra.mxu0 0.0
  %88 = vmatpush.msra.mxu0 0.0
  %89 = vmatpush.msra.mxu0 0.0
  %90 = vmatpush.msra.mxu0 0.0
  %91 = vmatpush.msra.mxu0 0.0
  %92 = vmatpush.msra.mxu0 0.0
  %93 = vmatpush.msra.mxu0 0.0
  %94 = vmatpush.msra.mxu0 0.0
  %95 = vmatpush.msra.mxu0 0.0
  %96 = vmatpush.msra.mxu0 0.0
  %97 = vmatpush.msra.mxu0 %v41
  %98 = vmatpush.msra.mxu0 %v17
  %99 = vmatmul.f32.gmra.mxu0 %v31
  %v100 = vpop.f32.mrf.mxu0
  %v101 = vadd.f32 %v25, %v100
  %102 = vdwg.mxu0
  %v103 = vmax.f32 %v61, 0.0
  %v104 = vmax.f32 %v81, 0.0
  %v105 = vmax.f32 %v101, 0.0
  %v108 = vrot.slane %v104, 4
  %v109 = vsel %vm33, %v103, %v108
  %111 = vst [vmem:[%s3] sm:$0xff] %v109
  %112 = vst [vmem:[%s3 + $0x8] sm:$0xf] %v105
  // Predicated region
  $region14: #{_lambda_.1} parent=0 // pred_check
    _
  $region15: #{_lambda_.1} parent=0 // pred_check_branch
    %114 = sbr.rel (0) target = $region17
  $region16: #{_lambda_.1} parent=0 // pred_region
    _
  $region17: #{_lambda_.1} parent=0 // pred_fallthru
    _
  // Predicated region
  $region18: #{_lambda_.1} parent=0 // pred_check
    _
  $region19: #{_lambda_.1} parent=0 // pred_check_branch
    %116 = sbr.rel (0) target = $region21
  $region20: #{_lambda_.1} parent=0 // pred_region
    _
  $region21: #{_lambda_.1} parent=0 // pred_fallthru
    _

</llo_original>
